<compile_context>
chip_gen: v7x
topology: tpu7x:2x2x1
jax: 0.10.0
libtpu: 0.0.40
codegen_flags: <defaults>
</compile_context>

<pallas_src>
import functools
import math

import jax
import jax.numpy as jnp
from jax.experimental import pallas as pl
from jax.experimental.pallas import tpu as pltpu


def _round_up(x, m):
    return (x + m - 1) // m * m


# ------------------------------ fused kernel ------------------------------ #
#
# buf_ref layout (VMEM scratch, per batch block):
#   rows [0, pad)        : permanently zero  -> causal left padding
#   rows [pad, pad + S)  : current layer's activation (time-major)
#
# Conv1d(kernel_size=K, dilation=d, stride=1) followed by Chomp1d is exactly
#   y[t, o] = b[o] + sum_k  x[t - d*(K-1-k), :] @ W_k[:, o]   (zero for t<0)
# so each tap k is a static sublane-shifted slice of buf_ref followed by one
# (bb*S, C) @ (C, C) matmul.

def _tcn_kernel(x_ref, w_ref, b_ref, o_ref, buf_ref, *,
                num_layers, kernel_size, dilation_base, pad, seq_len, bb):
    S = seq_len
    C = x_ref.shape[-1]
    M = bb * S

    # causal zero padding rows -- written once, never touched again
    buf_ref[:, :pad, :] = jnp.zeros((bb, pad, C), jnp.float32)
    # current activation = the input block
    buf_ref[:, pad:, :] = x_ref[...]

    h = None
    for l in range(num_layers):                      # static unroll (L is small)
        d = dilation_base ** l
        acc = jnp.broadcast_to(b_ref[l], (M, C))     # bias broadcast once/layer
        for k in range(kernel_size):
            shift = d * (kernel_size - 1 - k)
            xs = buf_ref[:, pad - shift:pad - shift + S, :]   # (bb, S, C), shifted in time
            acc = acc + jnp.dot(xs.reshape(M, C), w_ref[l, k],
                                preferred_element_type=jnp.float32)
        h = jnp.maximum(acc, 0.0)                    # ReLU
        if l < num_layers - 1:
            buf_ref[:, pad:, :] = h.reshape(bb, S, C)  # feed the next layer

    # TCNEncoder.forward returns x[:, -1, :]: last time step of final layer.
    o_ref[...] = h.reshape(bb, S, C)[:, S - 1:S, :]


def tcn_encoder_forward(x, weights, biases, *, kernel_size=3, dilation_base=2):
    """x: (B, S, input_size) f32.
    weights[l]: (Cout, Cin_l, K) (PyTorch Conv1d layout), biases[l]: (Cout,).
    Returns (B, Cout) == TCNEncoder.forward(x) (stride=1)."""
    B, S, cin0 = x.shape
    L = len(weights)
    K = kernel_size
    cout = weights[0].shape[0]

    # lane-dense channel padding (zero-padded weights/inputs are exact)
    C = _round_up(max(cin0, cout), 128)

    x_p = jnp.zeros((B, S, C), jnp.float32).at[:, :, :cin0].set(
        x.astype(jnp.float32))

    w_stack = jnp.zeros((L, K, C, C), jnp.float32)
    b_stack = jnp.zeros((L, 1, C), jnp.float32)
    for l, (w, b) in enumerate(zip(weights, biases)):
        cin_l = w.shape[1]
        # (Cout, Cin, K) -> (K, Cin, Cout) so the kernel computes x @ W_k
        w_stack = w_stack.at[l, :, :cin_l, :cout].set(
            jnp.transpose(w.astype(jnp.float32), (2, 1, 0)))
        b_stack = b_stack.at[l, 0, :cout].set(b.astype(jnp.float32))

    # max causal padding needed by any layer, rounded to a sublane multiple
    pad = _round_up(dilation_base ** (L - 1) * (K - 1), 8)

    # 2-way parallel grid when possible (keeps both v7x TensorCores busy);
    # within a block, (bb, S) is flattened into one matmul M dimension.
    bb = B // 2 if (B % 2 == 0 and B >= 2) else 1
    nb = B // bb

    kernel = functools.partial(
        _tcn_kernel, num_layers=L, kernel_size=K,
        dilation_base=dilation_base, pad=pad, seq_len=S, bb=bb)

    out = pl.pallas_call(
        kernel,
        out_shape=jax.ShapeDtypeStruct((B, 1, C), jnp.float32),
        grid_spec=pltpu.PrefetchScalarGridSpec(
            num_scalar_prefetch=0,
            grid=(nb,),
            in_specs=[
                pl.BlockSpec((bb, S, C), lambda i: (i, 0, 0)),
                pl.BlockSpec((L, K, C, C), lambda i: (0, 0, 0, 0)),
                pl.BlockSpec((L, 1, C), lambda i: (0, 0, 0)),
            ],
            out_specs=pl.BlockSpec((bb, 1, C), lambda i: (i, 0, 0)),
            scratch_shapes=[pltpu.VMEM((bb, pad + S, C), jnp.float32)],
        ),
        compiler_params=pltpu.CompilerParams(
            dimension_semantics=("parallel",)),
    )(x_p, w_stack, b_stack)

    return out[:, 0, :cout]


# --------------------------- pure-JAX reference ---------------------------- #
# Mirrors the PyTorch module op-for-op: permute -> [Conv1d -> Chomp1d -> ReLU]*L
# -> permute -> last time step.

def reference_forward(x, weights, biases, *, kernel_size=3, stride=1,
                      dilation_base=2):
    h = jnp.transpose(x, (0, 2, 1))                      # (B, C, S)
    for l, (w, b) in enumerate(zip(weights, biases)):
        d = dilation_base ** l
        p = d * (kernel_size - 1)
        y = jax.lax.conv_general_dilated(
            h, w, window_strides=(stride,), padding=[(p, p)],
            rhs_dilation=(d,), dimension_numbers=("NCH", "OIH", "NCH"))
        y = y + b[None, :, None]
        y = y[:, :, :y.shape[2] - p]                     # Chomp1d
        h = jax.nn.relu(y)
    h = jnp.transpose(h, (0, 2, 1))                      # (B, S, C)
    return h[:, -1, :]


# ------------------------ deterministic parameters -------------------------- #

def init_params(key, input_size, output_size, num_layers, kernel_size=3):
    weights, biases = [], []
    cin = input_size
    keys = jax.random.split(key, 2 * num_layers)
    for l in range(num_layers):
        fan_in = cin * kernel_size
        limit = math.sqrt(6.0 / fan_in)                  # ~ kaiming_uniform_
        w = jax.random.uniform(keys[2 * l], (output_size, cin, kernel_size),
                               jnp.float32, -limit, limit)
        b = 0.05 * jax.random.normal(keys[2 * l + 1], (output_size,),
                                     jnp.float32)
        weights.append(w)
        biases.append(b)
        cin = output_size
    return weights, biases


# --------------------------------- main ------------------------------------ #

if __name__ == "__main__":
    B, S = 2, 8
    input_size, output_size = 16, 32
    num_layers, kernel_size, dilation_base = 2, 3, 2

    key = jax.random.PRNGKey(0)
    kx, kp = jax.random.split(key)
    x = jax.random.normal(kx, (B, S, input_size), jnp.float32)
    weights, biases = init_params(kp, input_size, output_size, num_layers,
                                  kernel_size)

    out = tcn_encoder_forward(x, weights, biases, kernel_size=kernel_size,
                              dilation_base=dilation_base)
    out = jax.block_until_ready(out)

    ref = reference_forward(x, weights, biases, kernel_size=kernel_size,
                            stride=1, dilation_base=dilation_base)

    assert out.shape == (B, output_size)
    assert bool(jnp.all(jnp.isfinite(out)))
    assert bool(jnp.allclose(out, ref, atol=1e-4, rtol=1e-4))
    print("KERNEL_OK")
</pallas_src>

<mosaic_0001>
module attributes {stable_mosaic.version = 11 : i64} {
  func.func @_tcn_kernel(%arg0: i32, %arg1: memref<1x8x128xf32, #tpu.memory_space<vmem>>, %arg2: memref<2x3x128x128xf32, #tpu.memory_space<vmem>>, %arg3: memref<2x1x128xf32, #tpu.memory_space<vmem>>, %arg4: memref<1x1x128xf32, #tpu.memory_space<vmem>>, %arg5: memref<1x16x128xf32, #tpu.memory_space<vmem>>) attributes {dimension_semantics = [#tpu.dimension_semantics<parallel>], iteration_bounds = array<i64: 2>, scalar_prefetch = 0 : i64, scratch_operands = 1 : i64, tpu.core_type = #tpu.core_type<tc>, window_params = [{transform_indices = @transform_0, window_bounds = array<i64: 1, 8, 128>}, {pipeline_mode = #tpu.pipeline_mode<synchronous>, transform_indices = @transform_1, window_bounds = array<i64: 2, 3, 128, 128>}, {pipeline_mode = #tpu.pipeline_mode<synchronous>, transform_indices = @transform_2, window_bounds = array<i64: 2, 1, 128>}, {transform_indices = @transform_3, window_bounds = array<i64: 1, 1, 128>}]} {
    %cst = arith.constant 0.000000e+00 : f32
    %0 = vector.broadcast %cst : f32 to vector<1x8x128xf32>
    %c0 = arith.constant 0 : index
    %c0_0 = arith.constant 0 : index
    %c0_1 = arith.constant 0 : index
    %1 = vector.load %arg5[%c0, %c0_0, %c0_1] : memref<1x16x128xf32, #tpu.memory_space<vmem>>, vector<1x8x128xf32>
    tpu.vector_store %arg5[%c0, %c0_0, %c0_1], %0 {strides = array<i32>} : memref<1x16x128xf32, #tpu.memory_space<vmem>>, vector<1x8x128xf32>,
    %c0_2 = arith.constant 0 : index
    %c0_3 = arith.constant 0 : index
    %c0_4 = arith.constant 0 : index
    %2 = vector.load %arg1[%c0_2, %c0_3, %c0_4] : memref<1x8x128xf32, #tpu.memory_space<vmem>>, vector<1x8x128xf32>
    %c0_5 = arith.constant 0 : index
    %c8 = arith.constant 8 : index
    %c0_6 = arith.constant 0 : index
    %3 = vector.load %arg5[%c0_5, %c8, %c0_6] : memref<1x16x128xf32, #tpu.memory_space<vmem>>, vector<1x8x128xf32>
    tpu.vector_store %arg5[%c0_5, %c8, %c0_6], %2 {strides = array<i32>} : memref<1x16x128xf32, #tpu.memory_space<vmem>>, vector<1x8x128xf32>,
    %c0_7 = arith.constant 0 : index
    %c0_8 = arith.constant 0 : index
    %c0_9 = arith.constant 0 : index
    %4 = vector.load %arg3[%c0_7, %c0_8, %c0_9] : memref<2x1x128xf32, #tpu.memory_space<vmem>>, vector<1x1x128xf32>
    %5 = vector.shape_cast %4 : vector<1x1x128xf32> to vector<1x128xf32>
    %6 = vector.shape_cast %5 : vector<1x128xf32> to vector<1x128xf32>
    %7 = vector.broadcast %6 : vector<1x128xf32> to vector<8x128xf32>
    %c0_10 = arith.constant 0 : index
    %c6 = arith.constant 6 : index
    %c0_11 = arith.constant 0 : index
    %8 = vector.load %arg5[%c0_10, %c6, %c0_11] : memref<1x16x128xf32, #tpu.memory_space<vmem>>, vector<1x8x128xf32>
    %9 = vector.shape_cast %8 : vector<1x8x128xf32> to vector<8x128xf32>
    %c0_12 = arith.constant 0 : index
    %c0_13 = arith.constant 0 : index
    %c0_14 = arith.constant 0 : index
    %c0_15 = arith.constant 0 : index
    %10 = vector.load %arg2[%c0_12, %c0_13, %c0_14, %c0_15] : memref<2x3x128x128xf32, #tpu.memory_space<vmem>>, vector<1x1x128x128xf32>
    %11 = vector.shape_cast %10 : vector<1x1x128x128xf32> to vector<128x128xf32>
    %cst_16 = arith.constant dense<0.000000e+00> : vector<8x128xf32>
    %12 = tpu.matmul %9, %11, %cst_16 {dimension_numbers = #tpu.dot_dimension_numbers<[1], [0], [0], [1], [0, 0, 1, 1], [], []>} : vector<8x128xf32>, vector<128x128xf32>, vector<8x128xf32> -> vector<8x128xf32>
    %13 = arith.addf %7, %12 : vector<8x128xf32>
    %c0_17 = arith.constant 0 : index
    %c7 = arith.constant 7 : index
    %c0_18 = arith.constant 0 : index
    %14 = vector.load %arg5[%c0_17, %c7, %c0_18] : memref<1x16x128xf32, #tpu.memory_space<vmem>>, vector<1x8x128xf32>
    %15 = vector.shape_cast %14 : vector<1x8x128xf32> to vector<8x128xf32>
    %c0_19 = arith.constant 0 : index
    %c1 = arith.constant 1 : index
    %c0_20 = arith.constant 0 : index
    %c0_21 = arith.constant 0 : index
    %16 = vector.load %arg2[%c0_19, %c1, %c0_20, %c0_21] : memref<2x3x128x128xf32, #tpu.memory_space<vmem>>, vector<1x1x128x128xf32>
    %17 = vector.shape_cast %16 : vector<1x1x128x128xf32> to vector<128x128xf32>
    %cst_22 = arith.constant dense<0.000000e+00> : vector<8x128xf32>
    %18 = tpu.matmul %15, %17, %cst_22 {dimension_numbers = #tpu.dot_dimension_numbers<[1], [0], [0], [1], [0, 0, 1, 1], [], []>} : vector<8x128xf32>, vector<128x128xf32>, vector<8x128xf32> -> vector<8x128xf32>
    %19 = arith.addf %13, %18 : vector<8x128xf32>
    %c0_23 = arith.constant 0 : index
    %c8_24 = arith.constant 8 : index
    %c0_25 = arith.constant 0 : index
    %20 = vector.load %arg5[%c0_23, %c8_24, %c0_25] : memref<1x16x128xf32, #tpu.memory_space<vmem>>, vector<1x8x128xf32>
    %21 = vector.shape_cast %20 : vector<1x8x128xf32> to vector<8x128xf32>
    %c0_26 = arith.constant 0 : index
    %c2 = arith.constant 2 : index
    %c0_27 = arith.constant 0 : index
    %c0_28 = arith.constant 0 : index
    %22 = vector.load %arg2[%c0_26, %c2, %c0_27, %c0_28] : memref<2x3x128x128xf32, #tpu.memory_space<vmem>>, vector<1x1x128x128xf32>
    %23 = vector.shape_cast %22 : vector<1x1x128x128xf32> to vector<128x128xf32>
    %cst_29 = arith.constant dense<0.000000e+00> : vector<8x128xf32>
    %24 = tpu.matmul %21, %23, %cst_29 {dimension_numbers = #tpu.dot_dimension_numbers<[1], [0], [0], [1], [0, 0, 1, 1], [], []>} : vector<8x128xf32>, vector<128x128xf32>, vector<8x128xf32> -> vector<8x128xf32>
    %25 = arith.addf %19, %24 : vector<8x128xf32>
    %cst_30 = arith.constant 0.000000e+00 : f32
    %26 = vector.broadcast %cst_30 : f32 to vector<8x128xf32>
    %27 = arith.maximumf %25, %26 : vector<8x128xf32>
    %28 = vector.shape_cast %27 : vector<8x128xf32> to vector<1x8x128xf32>
    %c0_31 = arith.constant 0 : index
    %c8_32 = arith.constant 8 : index
    %c0_33 = arith.constant 0 : index
    %29 = vector.load %arg5[%c0_31, %c8_32, %c0_33] : memref<1x16x128xf32, #tpu.memory_space<vmem>>, vector<1x8x128xf32>
    tpu.vector_store %arg5[%c0_31, %c8_32, %c0_33], %28 {strides = array<i32>} : memref<1x16x128xf32, #tpu.memory_space<vmem>>, vector<1x8x128xf32>,
    %c1_34 = arith.constant 1 : index
    %c0_35 = arith.constant 0 : index
    %c0_36 = arith.constant 0 : index
    %30 = vector.load %arg3[%c1_34, %c0_35, %c0_36] : memref<2x1x128xf32, #tpu.memory_space<vmem>>, vector<1x1x128xf32>
    %31 = vector.shape_cast %30 : vector<1x1x128xf32> to vector<1x128xf32>
    %32 = vector.shape_cast %31 : vector<1x128xf32> to vector<1x128xf32>
    %33 = vector.broadcast %32 : vector<1x128xf32> to vector<8x128xf32>
    %c0_37 = arith.constant 0 : index
    %c4 = arith.constant 4 : index
    %c0_38 = arith.constant 0 : index
    %34 = vector.load %arg5[%c0_37, %c4, %c0_38] : memref<1x16x128xf32, #tpu.memory_space<vmem>>, vector<1x8x128xf32>
    %35 = vector.shape_cast %34 : vector<1x8x128xf32> to vector<8x128xf32>
    %c1_39 = arith.constant 1 : index
    %c0_40 = arith.constant 0 : index
    %c0_41 = arith.constant 0 : index
    %c0_42 = arith.constant 0 : index
    %36 = vector.load %arg2[%c1_39, %c0_40, %c0_41, %c0_42] : memref<2x3x128x128xf32, #tpu.memory_space<vmem>>, vector<1x1x128x128xf32>
    %37 = vector.shape_cast %36 : vector<1x1x128x128xf32> to vector<128x128xf32>
    %cst_43 = arith.constant dense<0.000000e+00> : vector<8x128xf32>
    %38 = tpu.matmul %35, %37, %cst_43 {dimension_numbers = #tpu.dot_dimension_numbers<[1], [0], [0], [1], [0, 0, 1, 1], [], []>} : vector<8x128xf32>, vector<128x128xf32>, vector<8x128xf32> -> vector<8x128xf32>
    %39 = arith.addf %33, %38 : vector<8x128xf32>
    %c0_44 = arith.constant 0 : index
    %c6_45 = arith.constant 6 : index
    %c0_46 = arith.constant 0 : index
    %40 = vector.load %arg5[%c0_44, %c6_45, %c0_46] : memref<1x16x128xf32, #tpu.memory_space<vmem>>, vector<1x8x128xf32>
    %41 = vector.shape_cast %40 : vector<1x8x128xf32> to vector<8x128xf32>
    %c1_47 = arith.constant 1 : index
    %c1_48 = arith.constant 1 : index
    %c0_49 = arith.constant 0 : index
    %c0_50 = arith.constant 0 : index
    %42 = vector.load %arg2[%c1_47, %c1_48, %c0_49, %c0_50] : memref<2x3x128x128xf32, #tpu.memory_space<vmem>>, vector<1x1x128x128xf32>
    %43 = vector.shape_cast %42 : vector<1x1x128x128xf32> to vector<128x128xf32>
    %cst_51 = arith.constant dense<0.000000e+00> : vector<8x128xf32>
    %44 = tpu.matmul %41, %43, %cst_51 {dimension_numbers = #tpu.dot_dimension_numbers<[1], [0], [0], [1], [0, 0, 1, 1], [], []>} : vector<8x128xf32>, vector<128x128xf32>, vector<8x128xf32> -> vector<8x128xf32>
    %45 = arith.addf %39, %44 : vector<8x128xf32>
    %c0_52 = arith.constant 0 : index
    %c8_53 = arith.constant 8 : index
    %c0_54 = arith.constant 0 : index
    %46 = vector.load %arg5[%c0_52, %c8_53, %c0_54] : memref<1x16x128xf32, #tpu.memory_space<vmem>>, vector<1x8x128xf32>
    %47 = vector.shape_cast %46 : vector<1x8x128xf32> to vector<8x128xf32>
    %c1_55 = arith.constant 1 : index
    %c2_56 = arith.constant 2 : index
    %c0_57 = arith.constant 0 : index
    %c0_58 = arith.constant 0 : index
    %48 = vector.load %arg2[%c1_55, %c2_56, %c0_57, %c0_58] : memref<2x3x128x128xf32, #tpu.memory_space<vmem>>, vector<1x1x128x128xf32>
    %49 = vector.shape_cast %48 : vector<1x1x128x128xf32> to vector<128x128xf32>
    %cst_59 = arith.constant dense<0.000000e+00> : vector<8x128xf32>
    %50 = tpu.matmul %47, %49, %cst_59 {dimension_numbers = #tpu.dot_dimension_numbers<[1], [0], [0], [1], [0, 0, 1, 1], [], []>} : vector<8x128xf32>, vector<128x128xf32>, vector<8x128xf32> -> vector<8x128xf32>
    %51 = arith.addf %45, %50 : vector<8x128xf32>
    %cst_60 = arith.constant 0.000000e+00 : f32
    %52 = vector.broadcast %cst_60 : f32 to vector<8x128xf32>
    %53 = arith.maximumf %51, %52 : vector<8x128xf32>
    %54 = vector.shape_cast %53 : vector<8x128xf32> to vector<1x8x128xf32>
    %55 = vector.extract_strided_slice %54 {offsets = [0, 7, 0], sizes = [1, 1, 128], strides = [1, 1, 1]} : vector<1x8x128xf32> to vector<1x1x128xf32>
    %c0_61 = arith.constant 0 : index
    %c0_62 = arith.constant 0 : index
    %c0_63 = arith.constant 0 : index
    %56 = vector.load %arg4[%c0_61, %c0_62, %c0_63] : memref<1x1x128xf32, #tpu.memory_space<vmem>>, vector<1x1x128xf32>
    tpu.vector_store %arg4[%c0_61, %c0_62, %c0_63], %55 {strides = array<i32>} : memref<1x1x128xf32, #tpu.memory_space<vmem>>, vector<1x1x128xf32>,
    return
  }
  func.func @transform_0(%arg0: i32) -> (i32, i32, i32) {
    %c0_i32 = arith.constant 0 : i32
    %c0_i32_0 = arith.constant 0 : i32
    %c0_i32_1 = arith.constant 0 : i32
    return %arg0, %c0_i32, %c0_i32_0 : i32, i32, i32
  }
  func.func @transform_1(%arg0: i32) -> (i32, i32, i32, i32) {
    %c0_i32 = arith.constant 0 : i32
    %c0_i32_0 = arith.constant 0 : i32
    %c0_i32_1 = arith.constant 0 : i32
    %c0_i32_2 = arith.constant 0 : i32
    %c0_i32_3 = arith.constant 0 : i32
    return %c0_i32, %c0_i32_0, %c0_i32_1, %c0_i32_2 : i32, i32, i32, i32
  }
  func.func @transform_2(%arg0: i32) -> (i32, i32, i32) {
    %c0_i32 = arith.constant 0 : i32
    %c0_i32_0 = arith.constant 0 : i32
    %c0_i32_1 = arith.constant 0 : i32
    %c0_i32_2 = arith.constant 0 : i32
    return %c0_i32, %c0_i32_0, %c0_i32_1 : i32, i32, i32
  }
  func.func @transform_3(%arg0: i32) -> (i32, i32, i32) {
    %c0_i32 = arith.constant 0 : i32
    %c0_i32_0 = arith.constant 0 : i32
    %c0_i32_1 = arith.constant 0 : i32
    return %arg0, %c0_i32, %c0_i32_0 : i32, i32, i32
  }
}

</mosaic_0001>

<llo_original>
// kernel: tpu_custom_call.1
$region0: #{tpu_custom_call.1}
  #allocation0 [shape = 'u32[]', space=smem, size = 0x4, offset = 0x4, fixed_abs, tag = 'smem constant byte address 0x4 - core index']
  #allocation1 [shape = 'u32[144,128]{1,0:T(1,128)}', space=vmem, size = 0x12000, scoped, tag = 'internal scratch']
  #allocation2 [shape = 'f32[1,16,128]{2,1,0:T(8,128)}', space=vmem, size = 0x2000, scoped, tag = 'scratch operand']
  %s0 = inlined_call_operand.hbm [shape: f32[2,8,128], index: 0, kind: input, shape index: {}]
  %s1 = inlined_call_operand.hbm [shape: f32[2,3,128,128], index: 1, kind: input, shape index: {}]
  %s2 = inlined_call_operand.vmem [shape: f32[2,1,128], index: 2, kind: input, shape index: {}]
  %s3 = inlined_call_operand.hbm [shape: f32[2,1,128], index: 3, kind: output, shape index: {}]
  %s4 = sld [smem:[#allocation0]]
  $region53: #{tpu_custom_call.1} parent=0
    _
  %s6 = ssub.s32 1, %s4
  %s7 = scalar_select 0, %s6, %s4
  $region1: #{tpu_custom_call.1} parent=0
    #allocation3 [shape = 'u8[8192]{0}', space=vmem, size = 0x2000, scoped, tag = 'input window, operand 0']
    #allocation4 [shape = 's32[2]{0}', space=sflag, size = 0x8, scoped, tag = 'scoped memory for tpu_custom_call.1']
    #allocation5 [shape = 's32[2]{0}', space=sflag, size = 0x8, scoped, tag = 'scoped memory for tpu_custom_call.1']
    #allocation6 [shape = 'u8[393216]{0}', space=vmem, size = 0x60000, scoped, tag = 'input window, operand 1, single buffered']
    #allocation7 [shape = 's32[1]{0}', space=sflag, size = 0x4, scoped, tag = 'scoped memory for tpu_custom_call.1']
    #allocation8 [shape = 'u8[1024]{0}', space=vmem, size = 0x400, scoped, tag = 'output window, operand 0']
    %8 = vsyncpa [#allocation4], 0
    %s9 = scalar_lea.sflag [#allocation4], 1
    %10 = vsyncpa %s9, 0
    %11 = vsyncpa [#allocation7], 0
    %12 = vsyncpa [#allocation5], 0
    %s13 = scalar_lea.sflag [#allocation5], 1
    %14 = vsyncpa %s13, 0
    loop: start=0, step=1, limit=4
    $region2: #{tpu_custom_call.1} parent=1 // loop_pre_header
      _
    $region3: #{tpu_custom_call.1} parent=1 // loop_header
      %s16 = sphi 0, %s20
      %p17 = scmp.ge.s32.totalorder %s16, 4
      %s26 = sphi 0, %s28
      %s29 = sphi 0, %s26
      %s30 = sphi 0, %s29
      %s46 = sphi 0, %s30
      %s50 = sphi 0, %s50
      %s52 = sphi 0, %s50
      %s53 = sphi 0, %s52
      %s67 = sphi 0, %s53
      %s71 = sphi 0, %s71
      %s73 = sphi 0, %s71
      %s74 = sphi 0, %s73
      %s88 = sphi 0, %s74
      %s94 = sphi 0, %s96
      %s97 = sphi 0, %s94
      %s98 = sphi 0, %s97
      %s114 = sphi 0, %s98
    $region4: #{tpu_custom_call.1} parent=1 // loop_header_branch
      %19 = sbr.rel (%p17) target = $region8
    $region5: #{tpu_custom_call.1} parent=1 // loop_body
      %s21 = ssub.s32 %s16, 1
      %s22 = ssub.s32 %s16, 2
      %s23 = sadd.s32 %s16, 1
      %s24 = ssub.s32 %s16, %s23
      %p25 = scmp.eq.s32.totalorder %s24, 0
      %s27 = sadd.s32 %s26, 1
      %s28 = scalar_select %p25, %s26, %s27
      %p31 = pneg %p25
      %p32 = scmp.eq.s32.totalorder %s16, 1
      %p33 = por %p31, %p32
      %p34 = scmp.ne.s32.totalorder %s26, %s29
      %p35 = scmp.eq.s32.totalorder %s16, 0
      %p36 = por %p34, %p35
      %p37 = scmp.ne.s32.totalorder %s26, %s29
      %p38 = scmp.eq.s32.totalorder %s21, 1
      %p39 = por %p37, %p38
      %p40 = scmp.ne.s32.totalorder %s29, %s30
      %p41 = scmp.eq.s32.totalorder %s21, 0
      %p42 = por %p40, %p41
      %p43 = scmp.ne.s32.totalorder %s29, %s30
      %p44 = scmp.eq.s32.totalorder %s22, 1
      %p45 = por %p43, %p44
      %p47 = scmp.ne.s32.totalorder %s30, %s46
      %p48 = scmp.eq.s32.totalorder %s22, 0
      %p49 = por %p47, %p48
      %s51 = sadd.s32 %s50, 1
      %p54 = scmp.eq.s32.totalorder %s16, 1
      %p55 = scmp.ne.s32.totalorder %s50, %s52
      %p56 = scmp.eq.s32.totalorder %s16, 0
      %p57 = por %p55, %p56
      %p58 = scmp.ne.s32.totalorder %s50, %s52
      %p59 = scmp.eq.s32.totalorder %s21, 1
      %p60 = por %p58, %p59
      %p61 = scmp.ne.s32.totalorder %s52, %s53
      %p62 = scmp.eq.s32.totalorder %s21, 0
      %p63 = por %p61, %p62
      %p64 = scmp.ne.s32.totalorder %s52, %s53
      %p65 = scmp.eq.s32.totalorder %s22, 1
      %p66 = por %p64, %p65
      %p68 = scmp.ne.s32.totalorder %s53, %s67
      %p69 = scmp.eq.s32.totalorder %s22, 0
      %p70 = por %p68, %p69
      %s72 = sadd.s32 %s71, 1
      %p75 = scmp.eq.s32.totalorder %s16, 1
      %p76 = scmp.ne.s32.totalorder %s71, %s73
      %p77 = scmp.eq.s32.totalorder %s16, 0
      %p78 = por %p76, %p77
      %p79 = scmp.ne.s32.totalorder %s71, %s73
      %p80 = scmp.eq.s32.totalorder %s21, 1
      %p81 = por %p79, %p80
      %p82 = scmp.ne.s32.totalorder %s73, %s74
      %p83 = scmp.eq.s32.totalorder %s21, 0
      %p84 = por %p82, %p83
      %p85 = scmp.ne.s32.totalorder %s73, %s74
      %p86 = scmp.eq.s32.totalorder %s22, 1
      %p87 = por %p85, %p86
      %p89 = scmp.ne.s32.totalorder %s74, %s88
      %p90 = scmp.eq.s32.totalorder %s22, 0
      %p91 = por %p89, %p90
      %s92 = ssub.s32 %s16, %s23
      %p93 = scmp.eq.s32.totalorder %s92, 0
      %s95 = sadd.s32 %s94, 1
      %s96 = scalar_select %p93, %s94, %s95
      %p99 = pneg %p93
      %p100 = scmp.eq.s32.totalorder %s16, 1
      %p101 = por %p99, %p100
      %p102 = scmp.ne.s32.totalorder %s94, %s97
      %p103 = scmp.eq.s32.totalorder %s16, 0
      %p104 = por %p102, %p103
      %p105 = scmp.ne.s32.totalorder %s94, %s97
      %p106 = scmp.eq.s32.totalorder %s21, 1
      %p107 = por %p105, %p106
      %p108 = scmp.ne.s32.totalorder %s97, %s98
      %p109 = scmp.eq.s32.totalorder %s21, 0
      %p110 = por %p108, %p109
      %p111 = scmp.ne.s32.totalorder %s97, %s98
      %p112 = scmp.eq.s32.totalorder %s22, 1
      %p113 = por %p111, %p112
      %p115 = scmp.ne.s32.totalorder %s98, %s114
      %p116 = scmp.eq.s32.totalorder %s22, 0
      %p117 = por %p115, %p116
      %p118 = scmp.le.s32.totalorder 1, %s16
      %p119 = scmp.lt.s32.totalorder %s16, 3
      %p120 = pnand %p118, %p119
      %p121 = pneg %p120
      // Predicated region
      $region9: #{tpu_custom_call.1} parent=5 // pred_check
        _
      $region10: #{tpu_custom_call.1} parent=5 // pred_check_branch
        %123 = sbr.rel (%p120) target = $region12
      $region11: #{tpu_custom_call.1} parent=5 // pred_region
        %s124 = ssub.s32 %s16, 1
        // Predicated region
        $region13: #{tpu_custom_call.1} parent=11 // pred_check
          %p125 = pneg %p63
        $region14: #{tpu_custom_call.1} parent=11 // pred_check_branch
          %127 = sbr.rel (%p125) target = $region16
        $region15: #{tpu_custom_call.1} parent=11 // pred_region
          %s129 = ssub.s32 12288, 12288
          %130 = vsyncadd [#allocation7], %s129
          %s131 = sshll.u32 [#allocation6], 4
          %s132 = int_to_ptr.vmem [resolvable:$true] %s131
          %137 = dma.hbm_to_vmem [thread:$0]  %s1, 12288, %s132, [#allocation7], 128, 128, 8
        $region16: #{tpu_custom_call.1} parent=11 // pred_fallthru
          _
        // Predicated region
        $region17: #{tpu_custom_call.1} parent=11 // pred_check
          %p138 = pneg %p84
        $region18: #{tpu_custom_call.1} parent=11 // pred_check_branch
          %140 = sbr.rel (%p138) target = $region20
        $region19: #{tpu_custom_call.1} parent=11 // pred_region
          _
        $region20: #{tpu_custom_call.1} parent=11 // pred_fallthru
          _
      $region12: #{tpu_custom_call.1} parent=5 // pred_fallthru
        _
      %p141 = scmp.lt.s32.totalorder %s16, 2
      // Predicated region
      $region21: #{tpu_custom_call.1} parent=5 // pred_check
        %p142 = pneg %p141
      $region22: #{tpu_custom_call.1} parent=5 // pred_check_branch
        %144 = sbr.rel (%p142) target = $region24
      $region23: #{tpu_custom_call.1} parent=5 // pred_region
        // Predicated region
        $region25: #{tpu_custom_call.1} parent=23 // pred_check
          %p145 = pneg %p36
        $region26: #{tpu_custom_call.1} parent=23 // pred_check_branch
          %147 = sbr.rel (%p145) target = $region28
        $region27: #{tpu_custom_call.1} parent=23 // pred_region
          %s148 = sand.u32 %s26, 1
          %s149 = scalar_lea.sflag [#allocation4], %s148
          %s150 = sand.u32 %s26, 1
          %s151 = smul.addr %s150, 8
          %s152 = scalar_lea.vmem [#allocation3], %s151
          %s154 = ssub.s32 128, 128
          %155 = vsyncadd %s149, %s154
          %s156 = smul.addr %s16, 128
          %s157 = scalar_lea.hbm %s0, %s156
          %s159 = sshll.u32 %s152, 4
          %s160 = int_to_ptr.vmem [resolvable:$true] %s159
          %162 = dma.hbm_to_vmem [thread:$0]  %s157, 128, %s160, %s149
        $region28: #{tpu_custom_call.1} parent=23 // pred_fallthru
          _
      $region24: #{tpu_custom_call.1} parent=5 // pred_fallthru
        _
      %p163 = scmp.le.s32.totalorder 1, %s16
      %p164 = scmp.lt.s32.totalorder %s16, 3
      %p165 = pnand %p163, %p164
      %p166 = pneg %p165
      // Predicated region
      $region29: #{tpu_custom_call.1} parent=5 // pred_check
        _
      $region30: #{tpu_custom_call.1} parent=5 // pred_check_branch
        %168 = sbr.rel (%p165) target = $region32
      $region31: #{tpu_custom_call.1} parent=5 // pred_region
        %s169 = ssub.s32 %s16, 1
        %s170 = sand.u32 %s29, 1
        %s171 = scalar_lea.sflag [#allocation4], %s170
        %s172 = sand.u32 %s29, 1
        %s173 = smul.addr %s172, 8
        %s174 = scalar_lea.vmem [#allocation3], %s173
        // Predicated region
        $region33: #{tpu_custom_call.1} parent=31 // pred_check
          %p175 = pneg %p42
        $region34: #{tpu_custom_call.1} parent=31 // pred_check_branch
          %177 = sbr.rel (%p175) target = $region36
        $region35: #{tpu_custom_call.1} parent=31 // pred_region
          %178 = dma.done %s171, 128
        $region36: #{tpu_custom_call.1} parent=31 // pred_fallthru
          _
        // Predicated region
        $region37: #{tpu_custom_call.1} parent=31 // pred_check
          %p179 = pneg %p63
        $region38: #{tpu_custom_call.1} parent=31 // pred_check_branch
          %181 = sbr.rel (%p179) target = $region40
        $region39: #{tpu_custom_call.1} parent=31 // pred_region
          %182 = dma.done [#allocation7], 12288
        $region40: #{tpu_custom_call.1} parent=31 // pred_fallthru
          _
        %s183 = sand.u32 %s29, 1
        %s184 = scalar_lea.sflag [#allocation4], %s183
        %s185 = sand.u32 %s29, 1
        %s186 = smul.addr %s185, 8
        %s187 = scalar_lea.vmem [#allocation3], %s186
        %p188 = pneg %p42
        %p189 = pneg %p39
        %p190 = pneg %p63
        %p191 = pneg %p60
        %p192 = pneg %p84
        %p193 = pneg %p81
        %p194 = pneg %p110
        %p195 = pneg %p107
        %s196 = sand.u32 %s97, 1
        %s197 = scalar_lea.sflag [#allocation5], %s196
        %s198 = sand.u32 %s97, 1
        %s199 = scalar_lea.vmem [#allocation8], %s198
        %200 = vst [vmem:[#allocation2] sm:$0xff] 0.0
        %v201 = vld [vmem:[%s174] sm:$0xff]
        %202 = vst [vmem:[#allocation2 + $0x8] sm:$0xff] %v201
        %v203 = vld [vmem:[%s2] sm:$0x1]
        %v205 = vlaneseq
        %v206 = vshrl.u32 %v205, 7
        %v207 = vsub.s32 0, %v206
        %v208 = vrot.slane %v203, %v207
        %v210 = vld [vmem:[#allocation2 + $0x6] sm:$0xff]
        %v211 = vld [vmem:[#allocation6] sm:$0xff]
        %v212 = vld [vmem:[#allocation6 + $0x8] sm:$0xff]
        %v213 = vld [vmem:[#allocation6 + $0x10] sm:$0xff]
        %v214 = vld [vmem:[#allocation6 + $0x18] sm:$0xff]
        %v215 = vld [vmem:[#allocation6 + $0x20] sm:$0xff]
        %v216 = vld [vmem:[#allocation6 + $0x28] sm:$0xff]
        %v217 = vld [vmem:[#allocation6 + $0x30] sm:$0xff]
        %v218 = vld [vmem:[#allocation6 + $0x38] sm:$0xff]
        %v219 = vld [vmem:[#allocation6 + $0x40] sm:$0xff]
        %v220 = vld [vmem:[#allocation6 + $0x48] sm:$0xff]
        %v221 = vld [vmem:[#allocation6 + $0x50] sm:$0xff]
        %v222 = vld [vmem:[#allocation6 + $0x58] sm:$0xff]
        %v223 = vld [vmem:[#allocation6 + $0x60] sm:$0xff]
        %v224 = vld [vmem:[#allocation6 + $0x68] sm:$0xff]
        %v225 = vld [vmem:[#allocation6 + $0x70] sm:$0xff]
        %v226 = vld [vmem:[#allocation6 + $0x78] sm:$0xff]
        %227 = vmatprep.subr.mxu0 0.0
        %228 = vmatpush1.msra.mxu0 %v211
        %229 = vmatprep.subr.mxu0 0.0
        %230 = vmatpush1.msra.mxu0 %v212
        %231 = vmatprep.subr.mxu0 0.0
        %232 = vmatpush1.msra.mxu0 %v213
        %233 = vmatprep.subr.mxu0 0.0
        %234 = vmatpush1.msra.mxu0 %v214
        %235 = vmatprep.subr.mxu0 0.0
        %236 = vmatpush1.msra.mxu0 %v215
        %237 = vmatprep.subr.mxu0 0.0
        %238 = vmatpush1.msra.mxu0 %v216
        %239 = vmatprep.subr.mxu0 0.0
        %240 = vmatpush1.msra.mxu0 %v217
        %241 = vmatprep.subr.mxu0 0.0
        %242 = vmatpush1.msra.mxu0 %v218
        %243 = vmatprep.subr.mxu0 0.0
        %244 = vmatpush1.msra.mxu0 %v219
        %245 = vmatprep.subr.mxu0 0.0
        %246 = vmatpush1.msra.mxu0 %v220
        %247 = vmatprep.subr.mxu0 0.0
        %248 = vmatpush1.msra.mxu0 %v221
        %249 = vmatprep.subr.mxu0 0.0
        %250 = vmatpush1.msra.mxu0 %v222
        %251 = vmatprep.subr.mxu0 0.0
        %252 = vmatpush1.msra.mxu0 %v223
        %253 = vmatprep.subr.mxu0 0.0
        %254 = vmatpush1.msra.mxu0 %v224
        %255 = vmatprep.subr.mxu0 0.0
        %256 = vmatpush1.msra.mxu0 %v225
        %257 = vmatprep.subr.mxu0 0.0
        %258 = vmatpush1.msra.mxu0 %v226
        %259 = vmatprep.subr.mxu0 0.0
        %260 = vmatpush1.msra.mxu0 0.0
        %261 = vmatprep.subr.mxu0 0.0
        %262 = vmatpush1.msra.mxu0 0.0
        %263 = vmatprep.subr.mxu0 0.0
        %264 = vmatpush1.msra.mxu0 0.0
        %265 = vmatprep.subr.mxu0 0.0
        %266 = vmatpush1.msra.mxu0 0.0
        %267 = vmatprep.subr.mxu0 0.0
        %268 = vmatpush1.msra.mxu0 0.0
        %269 = vmatprep.subr.mxu0 0.0
        %270 = vmatpush1.msra.mxu0 0.0
        %271 = vmatprep.subr.mxu0 0.0
        %272 = vmatpush1.msra.mxu0 0.0
        %273 = vmatprep.subr.mxu0 0.0
        %274 = vmatpush1.msra.mxu0 0.0
        %275 = vmatprep.subr.mxu0 0.0
        %276 = vmatpush1.msra.mxu0 0.0
        %277 = vmatprep.subr.mxu0 0.0
        %278 = vmatpush1.msra.mxu0 0.0
        %279 = vmatprep.subr.mxu0 0.0
        %280 = vmatpush1.msra.mxu0 0.0
        %281 = vmatprep.subr.mxu0 0.0
        %282 = vmatpush1.msra.mxu0 0.0
        %283 = vmatprep.subr.mxu0 0.0
        %284 = vmatpush1.msra.mxu0 0.0
        %285 = vmatprep.subr.mxu0 0.0
        %286 = vmatpush1.msra.mxu0 0.0
        %287 = vmatprep.subr.mxu0 0.0
        %288 = vmatpush1.msra.mxu0 0.0
        %289 = vmatprep.subr.mxu0 0.0
        %290 = vmatpush1.msra.mxu0 0.0
        %291 = vmatprep.mubr.f32.mxu0 0.0
        %292 = vmatmul.mubr.f32.gmra.mrb[0].mxu0 %v210
        %v293 = vpop.f32.mrb[0].mxu0
        %v294 = vadd.f32 0.0, %v293
        %v295 = vpop.f32.mrb[0].mxu0
        %296 = vdwg.mxu0
        %v297 = vadd.f32 %v208, %v294
        %v298 = vld [vmem:[#allocation2 + $0x7] sm:$0xff]
        %s299 = scalar_lea.vmem [#allocation6], 128
        %v300 = vld [vmem:[%s299] sm:$0xff]
        %v301 = vld [vmem:[%s299 + $0x8] sm:$0xff]
        %v302 = vld [vmem:[%s299 + $0x10] sm:$0xff]
        %v303 = vld [vmem:[%s299 + $0x18] sm:$0xff]
        %v304 = vld [vmem:[%s299 + $0x20] sm:$0xff]
        %v305 = vld [vmem:[%s299 + $0x28] sm:$0xff]
        %v306 = vld [vmem:[%s299 + $0x30] sm:$0xff]
        %v307 = vld [vmem:[%s299 + $0x38] sm:$0xff]
        %v308 = vld [vmem:[%s299 + $0x40] sm:$0xff]
        %v309 = vld [vmem:[%s299 + $0x48] sm:$0xff]
        %v310 = vld [vmem:[%s299 + $0x50] sm:$0xff]
        %v311 = vld [vmem:[%s299 + $0x58] sm:$0xff]
        %v312 = vld [vmem:[%s299 + $0x60] sm:$0xff]
        %v313 = vld [vmem:[%s299 + $0x68] sm:$0xff]
        %v314 = vld [vmem:[%s299 + $0x70] sm:$0xff]
        %v315 = vld [vmem:[%s299 + $0x78] sm:$0xff]
        %316 = vmatprep.subr.mxu0 0.0
        %317 = vmatpush1.msra.mxu0 %v300
        %318 = vmatprep.subr.mxu0 0.0
        %319 = vmatpush1.msra.mxu0 %v301
        %320 = vmatprep.subr.mxu0 0.0
        %321 = vmatpush1.msra.mxu0 %v302
        %322 = vmatprep.subr.mxu0 0.0
        %323 = vmatpush1.msra.mxu0 %v303
        %324 = vmatprep.subr.mxu0 0.0
        %325 = vmatpush1.msra.mxu0 %v304
        %326 = vmatprep.subr.mxu0 0.0
        %327 = vmatpush1.msra.mxu0 %v305
        %328 = vmatprep.subr.mxu0 0.0
        %329 = vmatpush1.msra.mxu0 %v306
        %330 = vmatprep.subr.mxu0 0.0
        %331 = vmatpush1.msra.mxu0 %v307
        %332 = vmatprep.subr.mxu0 0.0
        %333 = vmatpush1.msra.mxu0 %v308
        %334 = vmatprep.subr.mxu0 0.0
        %335 = vmatpush1.msra.mxu0 %v309
        %336 = vmatprep.subr.mxu0 0.0
        %337 = vmatpush1.msra.mxu0 %v310
        %338 = vmatprep.subr.mxu0 0.0
        %339 = vmatpush1.msra.mxu0 %v311
        %340 = vmatprep.subr.mxu0 0.0
        %341 = vmatpush1.msra.mxu0 %v312
        %342 = vmatprep.subr.mxu0 0.0
        %343 = vmatpush1.msra.mxu0 %v313
        %344 = vmatprep.subr.mxu0 0.0
        %345 = vmatpush1.msra.mxu0 %v314
        %346 = vmatprep.subr.mxu0 0.0
        %347 = vmatpush1.msra.mxu0 %v315
        %348 = vmatprep.subr.mxu0 0.0
        %349 = vmatpush1.msra.mxu0 0.0
        %350 = vmatprep.subr.mxu0 0.0
        %351 = vmatpush1.msra.mxu0 0.0
        %352 = vmatprep.subr.mxu0 0.0
        %353 = vmatpush1.msra.mxu0 0.0
        %354 = vmatprep.subr.mxu0 0.0
        %355 = vmatpush1.msra.mxu0 0.0
        %356 = vmatprep.subr.mxu0 0.0
        %357 = vmatpush1.msra.mxu0 0.0
        %358 = vmatprep.subr.mxu0 0.0
        %359 = vmatpush1.msra.mxu0 0.0
        %360 = vmatprep.subr.mxu0 0.0
        %361 = vmatpush1.msra.mxu0 0.0
        %362 = vmatprep.subr.mxu0 0.0
        %363 = vmatpush1.msra.mxu0 0.0
        %364 = vmatprep.subr.mxu0 0.0
        %365 = vmatpush1.msra.mxu0 0.0
        %366 = vmatprep.subr.mxu0 0.0
        %367 = vmatpush1.msra.mxu0 0.0
        %368 = vmatprep.subr.mxu0 0.0
        %369 = vmatpush1.msra.mxu0 0.0
        %370 = vmatprep.subr.mxu0 0.0
        %371 = vmatpush1.msra.mxu0 0.0
        %372 = vmatprep.subr.mxu0 0.0
        %373 = vmatpush1.msra.mxu0 0.0
        %374 = vmatprep.subr.mxu0 0.0
        %375 = vmatpush1.msra.mxu0 0.0
        %376 = vmatprep.subr.mxu0 0.0
        %377 = vmatpush1.msra.mxu0 0.0
        %378 = vmatprep.subr.mxu0 0.0
        %379 = vmatpush1.msra.mxu0 0.0
        %380 = vmatprep.mubr.f32.mxu0 0.0
        %381 = vmatmul.mubr.f32.gmra.mrb[0].mxu0 %v298
        %v382 = vpop.f32.mrb[0].mxu0
        %v383 = vadd.f32 0.0, %v382
        %v384 = vpop.f32.mrb[0].mxu0
        %385 = vdwg.mxu0
        %v386 = vadd.f32 %v297, %v383
        %v387 = vld [vmem:[#allocation2 + $0x8] sm:$0xff]
        %s388 = scalar_lea.vmem [#allocation6], 256
        %v389 = vld [vmem:[%s388] sm:$0xff]
        %v390 = vld [vmem:[%s388 + $0x8] sm:$0xff]
        %v391 = vld [vmem:[%s388 + $0x10] sm:$0xff]
        %v392 = vld [vmem:[%s388 + $0x18] sm:$0xff]
        %v393 = vld [vmem:[%s388 + $0x20] sm:$0xff]
        %v394 = vld [vmem:[%s388 + $0x28] sm:$0xff]
        %v395 = vld [vmem:[%s388 + $0x30] sm:$0xff]
        %v396 = vld [vmem:[%s388 + $0x38] sm:$0xff]
        %v397 = vld [vmem:[%s388 + $0x40] sm:$0xff]
        %v398 = vld [vmem:[%s388 + $0x48] sm:$0xff]
        %v399 = vld [vmem:[%s388 + $0x50] sm:$0xff]
        %v400 = vld [vmem:[%s388 + $0x58] sm:$0xff]
        %v401 = vld [vmem:[%s388 + $0x60] sm:$0xff]
        %v402 = vld [vmem:[%s388 + $0x68] sm:$0xff]
        %v403 = vld [vmem:[%s388 + $0x70] sm:$0xff]
        %v404 = vld [vmem:[%s388 + $0x78] sm:$0xff]
        %405 = vmatprep.subr.mxu0 0.0
        %406 = vmatpush1.msra.mxu0 %v389
        %407 = vmatprep.subr.mxu0 0.0
        %408 = vmatpush1.msra.mxu0 %v390
        %409 = vmatprep.subr.mxu0 0.0
        %410 = vmatpush1.msra.mxu0 %v391
        %411 = vmatprep.subr.mxu0 0.0
        %412 = vmatpush1.msra.mxu0 %v392
        %413 = vmatprep.subr.mxu0 0.0
        %414 = vmatpush1.msra.mxu0 %v393
        %415 = vmatprep.subr.mxu0 0.0
        %416 = vmatpush1.msra.mxu0 %v394
        %417 = vmatprep.subr.mxu0 0.0
        %418 = vmatpush1.msra.mxu0 %v395
        %419 = vmatprep.subr.mxu0 0.0
        %420 = vmatpush1.msra.mxu0 %v396
        %421 = vmatprep.subr.mxu0 0.0
        %422 = vmatpush1.msra.mxu0 %v397
        %423 = vmatprep.subr.mxu0 0.0
        %424 = vmatpush1.msra.mxu0 %v398
        %425 = vmatprep.subr.mxu0 0.0
        %426 = vmatpush1.msra.mxu0 %v399
        %427 = vmatprep.subr.mxu0 0.0
        %428 = vmatpush1.msra.mxu0 %v400
        %429 = vmatprep.subr.mxu0 0.0
        %430 = vmatpush1.msra.mxu0 %v401
        %431 = vmatprep.subr.mxu0 0.0
        %432 = vmatpush1.msra.mxu0 %v402
        %433 = vmatprep.subr.mxu0 0.0
        %434 = vmatpush1.msra.mxu0 %v403
        %435 = vmatprep.subr.mxu0 0.0
        %436 = vmatpush1.msra.mxu0 %v404
        %437 = vmatprep.subr.mxu0 0.0
        %438 = vmatpush1.msra.mxu0 0.0
        %439 = vmatprep.subr.mxu0 0.0
        %440 = vmatpush1.msra.mxu0 0.0
        %441 = vmatprep.subr.mxu0 0.0
        %442 = vmatpush1.msra.mxu0 0.0
        %443 = vmatprep.subr.mxu0 0.0
        %444 = vmatpush1.msra.mxu0 0.0
        %445 = vmatprep.subr.mxu0 0.0
        %446 = vmatpush1.msra.mxu0 0.0
        %447 = vmatprep.subr.mxu0 0.0
        %448 = vmatpush1.msra.mxu0 0.0
        %449 = vmatprep.subr.mxu0 0.0
        %450 = vmatpush1.msra.mxu0 0.0
        %451 = vmatprep.subr.mxu0 0.0
        %452 = vmatpush1.msra.mxu0 0.0
        %453 = vmatprep.subr.mxu0 0.0
        %454 = vmatpush1.msra.mxu0 0.0
        %455 = vmatprep.subr.mxu0 0.0
        %456 = vmatpush1.msra.mxu0 0.0
        %457 = vmatprep.subr.mxu0 0.0
        %458 = vmatpush1.msra.mxu0 0.0
        %459 = vmatprep.subr.mxu0 0.0
        %460 = vmatpush1.msra.mxu0 0.0
        %461 = vmatprep.subr.mxu0 0.0
        %462 = vmatpush1.msra.mxu0 0.0
        %463 = vmatprep.subr.mxu0 0.0
        %464 = vmatpush1.msra.mxu0 0.0
        %465 = vmatprep.subr.mxu0 0.0
        %466 = vmatpush1.msra.mxu0 0.0
        %467 = vmatprep.subr.mxu0 0.0
        %468 = vmatpush1.msra.mxu0 0.0
        %469 = vmatprep.mubr.f32.mxu0 0.0
        %470 = vmatmul.mubr.f32.gmra.mrb[0].mxu0 %v387
        %v471 = vpop.f32.mrb[0].mxu0
        %v472 = vadd.f32 0.0, %v471
        %v473 = vpop.f32.mrb[0].mxu0
        %474 = vdwg.mxu0
        %v475 = vadd.f32 %v386, %v472
        %v476 = vmax.f32 %v475, 0.0
        %477 = vst [vmem:[#allocation2 + $0x8] sm:$0xff] %v476
        %s478 = scalar_lea.vmem %s2, 1
        %v479 = vld [vmem:[%s478] sm:$0x1]
        %v481 = vlaneseq
        %v482 = vshrl.u32 %v481, 7
        %v483 = vsub.s32 0, %v482
        %v484 = vrot.slane %v479, %v483
        %v486 = vld [vmem:[#allocation2 + $0x4] sm:$0xff]
        %s487 = scalar_lea.vmem [#allocation6], 384
        %v488 = vld [vmem:[%s487] sm:$0xff]
        %v489 = vld [vmem:[%s487 + $0x8] sm:$0xff]
        %v490 = vld [vmem:[%s487 + $0x10] sm:$0xff]
        %v491 = vld [vmem:[%s487 + $0x18] sm:$0xff]
        %v492 = vld [vmem:[%s487 + $0x20] sm:$0xff]
        %v493 = vld [vmem:[%s487 + $0x28] sm:$0xff]
        %v494 = vld [vmem:[%s487 + $0x30] sm:$0xff]
        %v495 = vld [vmem:[%s487 + $0x38] sm:$0xff]
        %v496 = vld [vmem:[%s487 + $0x40] sm:$0xff]
        %v497 = vld [vmem:[%s487 + $0x48] sm:$0xff]
        %v498 = vld [vmem:[%s487 + $0x50] sm:$0xff]
        %v499 = vld [vmem:[%s487 + $0x58] sm:$0xff]
        %v500 = vld [vmem:[%s487 + $0x60] sm:$0xff]
        %v501 = vld [vmem:[%s487 + $0x68] sm:$0xff]
        %v502 = vld [vmem:[%s487 + $0x70] sm:$0xff]
        %v503 = vld [vmem:[%s487 + $0x78] sm:$0xff]
        %504 = vmatprep.subr.mxu0 0.0
        %505 = vmatpush1.msra.mxu0 %v488
        %506 = vmatprep.subr.mxu0 0.0
        %507 = vmatpush1.msra.mxu0 %v489
        %508 = vmatprep.subr.mxu0 0.0
        %509 = vmatpush1.msra.mxu0 %v490
        %510 = vmatprep.subr.mxu0 0.0
        %511 = vmatpush1.msra.mxu0 %v491
        %512 = vmatprep.subr.mxu0 0.0
        %513 = vmatpush1.msra.mxu0 %v492
        %514 = vmatprep.subr.mxu0 0.0
        %515 = vmatpush1.msra.mxu0 %v493
        %516 = vmatprep.subr.mxu0 0.0
        %517 = vmatpush1.msra.mxu0 %v494
        %518 = vmatprep.subr.mxu0 0.0
        %519 = vmatpush1.msra.mxu0 %v495
        %520 = vmatprep.subr.mxu0 0.0
        %521 = vmatpush1.msra.mxu0 %v496
        %522 = vmatprep.subr.mxu0 0.0
        %523 = vmatpush1.msra.mxu0 %v497
        %524 = vmatprep.subr.mxu0 0.0
        %525 = vmatpush1.msra.mxu0 %v498
        %526 = vmatprep.subr.mxu0 0.0
        %527 = vmatpush1.msra.mxu0 %v499
        %528 = vmatprep.subr.mxu0 0.0
        %529 = vmatpush1.msra.mxu0 %v500
        %530 = vmatprep.subr.mxu0 0.0
        %531 = vmatpush1.msra.mxu0 %v501
        %532 = vmatprep.subr.mxu0 0.0
        %533 = vmatpush1.msra.mxu0 %v502
        %534 = vmatprep.subr.mxu0 0.0
        %535 = vmatpush1.msra.mxu0 %v503
        %536 = vmatprep.subr.mxu0 0.0
        %537 = vmatpush1.msra.mxu0 0.0
        %538 = vmatprep.subr.mxu0 0.0
        %539 = vmatpush1.msra.mxu0 0.0
        %540 = vmatprep.subr.mxu0 0.0
        %541 = vmatpush1.msra.mxu0 0.0
        %542 = vmatprep.subr.mxu0 0.0
        %543 = vmatpush1.msra.mxu0 0.0
        %544 = vmatprep.subr.mxu0 0.0
        %545 = vmatpush1.msra.mxu0 0.0
        %546 = vmatprep.subr.mxu0 0.0
        %547 = vmatpush1.msra.mxu0 0.0
        %548 = vmatprep.subr.mxu0 0.0
        %549 = vmatpush1.msra.mxu0 0.0
        %550 = vmatprep.subr.mxu0 0.0
        %551 = vmatpush1.msra.mxu0 0.0
        %552 = vmatprep.subr.mxu0 0.0
        %553 = vmatpush1.msra.mxu0 0.0
        %554 = vmatprep.subr.mxu0 0.0
        %555 = vmatpush1.msra.mxu0 0.0
        %556 = vmatprep.subr.mxu0 0.0
        %557 = vmatpush1.msra.mxu0 0.0
        %558 = vmatprep.subr.mxu0 0.0
        %559 = vmatpush1.msra.mxu0 0.0
        %560 = vmatprep.subr.mxu0 0.0
        %561 = vmatpush1.msra.mxu0 0.0
        %562 = vmatprep.subr.mxu0 0.0
        %563 = vmatpush1.msra.mxu0 0.0
        %564 = vmatprep.subr.mxu0 0.0
        %565 = vmatpush1.msra.mxu0 0.0
        %566 = vmatprep.subr.mxu0 0.0
        %567 = vmatpush1.msra.mxu0 0.0
        %568 = vmatprep.mubr.f32.mxu0 0.0
        %569 = vmatmul.mubr.f32.gmra.mrb[0].mxu0 %v486
        %v570 = vpop.f32.mrb[0].mxu0
        %v571 = vadd.f32 0.0, %v570
        %v572 = vpop.f32.mrb[0].mxu0
        %573 = vdwg.mxu0
        %v574 = vadd.f32 %v484, %v571
        %v575 = vld [vmem:[#allocation2 + $0x6] sm:$0xff]
        %s576 = scalar_lea.vmem [#allocation6], 512
        %v577 = vld [vmem:[%s576] sm:$0xff]
        %v578 = vld [vmem:[%s576 + $0x8] sm:$0xff]
        %v579 = vld [vmem:[%s576 + $0x10] sm:$0xff]
        %v580 = vld [vmem:[%s576 + $0x18] sm:$0xff]
        %v581 = vld [vmem:[%s576 + $0x20] sm:$0xff]
        %v582 = vld [vmem:[%s576 + $0x28] sm:$0xff]
        %v583 = vld [vmem:[%s576 + $0x30] sm:$0xff]
        %v584 = vld [vmem:[%s576 + $0x38] sm:$0xff]
        %v585 = vld [vmem:[%s576 + $0x40] sm:$0xff]
        %v586 = vld [vmem:[%s576 + $0x48] sm:$0xff]
        %v587 = vld [vmem:[%s576 + $0x50] sm:$0xff]
        %v588 = vld [vmem:[%s576 + $0x58] sm:$0xff]
        %v589 = vld [vmem:[%s576 + $0x60] sm:$0xff]
        %v590 = vld [vmem:[%s576 + $0x68] sm:$0xff]
        %v591 = vld [vmem:[%s576 + $0x70] sm:$0xff]
        %v592 = vld [vmem:[%s576 + $0x78] sm:$0xff]
        %593 = vmatprep.subr.mxu0 0.0
        %594 = vmatpush1.msra.mxu0 %v577
        %595 = vmatprep.subr.mxu0 0.0
        %596 = vmatpush1.msra.mxu0 %v578
        %597 = vmatprep.subr.mxu0 0.0
        %598 = vmatpush1.msra.mxu0 %v579
        %599 = vmatprep.subr.mxu0 0.0
        %600 = vmatpush1.msra.mxu0 %v580
        %601 = vmatprep.subr.mxu0 0.0
        %602 = vmatpush1.msra.mxu0 %v581
        %603 = vmatprep.subr.mxu0 0.0
        %604 = vmatpush1.msra.mxu0 %v582
        %605 = vmatprep.subr.mxu0 0.0
        %606 = vmatpush1.msra.mxu0 %v583
        %607 = vmatprep.subr.mxu0 0.0
        %608 = vmatpush1.msra.mxu0 %v584
        %609 = vmatprep.subr.mxu0 0.0
        %610 = vmatpush1.msra.mxu0 %v585
        %611 = vmatprep.subr.mxu0 0.0
        %612 = vmatpush1.msra.mxu0 %v586
        %613 = vmatprep.subr.mxu0 0.0
        %614 = vmatpush1.msra.mxu0 %v587
        %615 = vmatprep.subr.mxu0 0.0
        %616 = vmatpush1.msra.mxu0 %v588
        %617 = vmatprep.subr.mxu0 0.0
        %618 = vmatpush1.msra.mxu0 %v589
        %619 = vmatprep.subr.mxu0 0.0
        %620 = vmatpush1.msra.mxu0 %v590
        %621 = vmatprep.subr.mxu0 0.0
        %622 = vmatpush1.msra.mxu0 %v591
        %623 = vmatprep.subr.mxu0 0.0
        %624 = vmatpush1.msra.mxu0 %v592
        %625 = vmatprep.subr.mxu0 0.0
        %626 = vmatpush1.msra.mxu0 0.0
        %627 = vmatprep.subr.mxu0 0.0
        %628 = vmatpush1.msra.mxu0 0.0
        %629 = vmatprep.subr.mxu0 0.0
        %630 = vmatpush1.msra.mxu0 0.0
        %631 = vmatprep.subr.mxu0 0.0
        %632 = vmatpush1.msra.mxu0 0.0
        %633 = vmatprep.subr.mxu0 0.0
        %634 = vmatpush1.msra.mxu0 0.0
        %635 = vmatprep.subr.mxu0 0.0
        %636 = vmatpush1.msra.mxu0 0.0
        %637 = vmatprep.subr.mxu0 0.0
        %638 = vmatpush1.msra.mxu0 0.0
        %639 = vmatprep.subr.mxu0 0.0
        %640 = vmatpush1.msra.mxu0 0.0
        %641 = vmatprep.subr.mxu0 0.0
        %642 = vmatpush1.msra.mxu0 0.0
        %643 = vmatprep.subr.mxu0 0.0
        %644 = vmatpush1.msra.mxu0 0.0
        %645 = vmatprep.subr.mxu0 0.0
        %646 = vmatpush1.msra.mxu0 0.0
        %647 = vmatprep.subr.mxu0 0.0
        %648 = vmatpush1.msra.mxu0 0.0
        %649 = vmatprep.subr.mxu0 0.0
        %650 = vmatpush1.msra.mxu0 0.0
        %651 = vmatprep.subr.mxu0 0.0
        %652 = vmatpush1.msra.mxu0 0.0
        %653 = vmatprep.subr.mxu0 0.0
        %654 = vmatpush1.msra.mxu0 0.0
        %655 = vmatprep.subr.mxu0 0.0
        %656 = vmatpush1.msra.mxu0 0.0
        %657 = vmatprep.mubr.f32.mxu0 0.0
        %658 = vmatmul.mubr.f32.gmra.mrb[0].mxu0 %v575
        %v659 = vpop.f32.mrb[0].mxu0
        %v660 = vadd.f32 0.0, %v659
        %v661 = vpop.f32.mrb[0].mxu0
        %662 = vdwg.mxu0
        %v663 = vadd.f32 %v574, %v660
        %v664 = vld [vmem:[#allocation2 + $0x8] sm:$0xff]
        %s665 = scalar_lea.vmem [#allocation6], 640
        %v666 = vld [vmem:[%s665] sm:$0xff]
        %v667 = vld [vmem:[%s665 + $0x8] sm:$0xff]
        %v668 = vld [vmem:[%s665 + $0x10] sm:$0xff]
        %v669 = vld [vmem:[%s665 + $0x18] sm:$0xff]
        %v670 = vld [vmem:[%s665 + $0x20] sm:$0xff]
        %v671 = vld [vmem:[%s665 + $0x28] sm:$0xff]
        %v672 = vld [vmem:[%s665 + $0x30] sm:$0xff]
        %v673 = vld [vmem:[%s665 + $0x38] sm:$0xff]
        %v674 = vld [vmem:[%s665 + $0x40] sm:$0xff]
        %v675 = vld [vmem:[%s665 + $0x48] sm:$0xff]
        %v676 = vld [vmem:[%s665 + $0x50] sm:$0xff]
        %v677 = vld [vmem:[%s665 + $0x58] sm:$0xff]
        %v678 = vld [vmem:[%s665 + $0x60] sm:$0xff]
        %v679 = vld [vmem:[%s665 + $0x68] sm:$0xff]
        %v680 = vld [vmem:[%s665 + $0x70] sm:$0xff]
        %v681 = vld [vmem:[%s665 + $0x78] sm:$0xff]
        %682 = vmatprep.subr.mxu0 0.0
        %683 = vmatpush1.msra.mxu0 %v666
        %684 = vmatprep.subr.mxu0 0.0
        %685 = vmatpush1.msra.mxu0 %v667
        %686 = vmatprep.subr.mxu0 0.0
        %687 = vmatpush1.msra.mxu0 %v668
        %688 = vmatprep.subr.mxu0 0.0
        %689 = vmatpush1.msra.mxu0 %v669
        %690 = vmatprep.subr.mxu0 0.0
        %691 = vmatpush1.msra.mxu0 %v670
        %692 = vmatprep.subr.mxu0 0.0
        %693 = vmatpush1.msra.mxu0 %v671
        %694 = vmatprep.subr.mxu0 0.0
        %695 = vmatpush1.msra.mxu0 %v672
        %696 = vmatprep.subr.mxu0 0.0
        %697 = vmatpush1.msra.mxu0 %v673
        %698 = vmatprep.subr.mxu0 0.0
        %699 = vmatpush1.msra.mxu0 %v674
        %700 = vmatprep.subr.mxu0 0.0
        %701 = vmatpush1.msra.mxu0 %v675
        %702 = vmatprep.subr.mxu0 0.0
        %703 = vmatpush1.msra.mxu0 %v676
        %704 = vmatprep.subr.mxu0 0.0
        %705 = vmatpush1.msra.mxu0 %v677
        %706 = vmatprep.subr.mxu0 0.0
        %707 = vmatpush1.msra.mxu0 %v678
        %708 = vmatprep.subr.mxu0 0.0
        %709 = vmatpush1.msra.mxu0 %v679
        %710 = vmatprep.subr.mxu0 0.0
        %711 = vmatpush1.msra.mxu0 %v680
        %712 = vmatprep.subr.mxu0 0.0
        %713 = vmatpush1.msra.mxu0 %v681
        %714 = vmatprep.subr.mxu0 0.0
        %715 = vmatpush1.msra.mxu0 0.0
        %716 = vmatprep.subr.mxu0 0.0
        %717 = vmatpush1.msra.mxu0 0.0
        %718 = vmatprep.subr.mxu0 0.0
        %719 = vmatpush1.msra.mxu0 0.0
        %720 = vmatprep.subr.mxu0 0.0
        %721 = vmatpush1.msra.mxu0 0.0
        %722 = vmatprep.subr.mxu0 0.0
        %723 = vmatpush1.msra.mxu0 0.0
        %724 = vmatprep.subr.mxu0 0.0
        %725 = vmatpush1.msra.mxu0 0.0
        %726 = vmatprep.subr.mxu0 0.0
        %727 = vmatpush1.msra.mxu0 0.0
        %728 = vmatprep.subr.mxu0 0.0
        %729 = vmatpush1.msra.mxu0 0.0
        %730 = vmatprep.subr.mxu0 0.0
        %731 = vmatpush1.msra.mxu0 0.0
        %732 = vmatprep.subr.mxu0 0.0
        %733 = vmatpush1.msra.mxu0 0.0
        %734 = vmatprep.subr.mxu0 0.0
        %735 = vmatpush1.msra.mxu0 0.0
        %736 = vmatprep.subr.mxu0 0.0
        %737 = vmatpush1.msra.mxu0 0.0
        %738 = vmatprep.subr.mxu0 0.0
        %739 = vmatpush1.msra.mxu0 0.0
        %740 = vmatprep.subr.mxu0 0.0
        %741 = vmatpush1.msra.mxu0 0.0
        %742 = vmatprep.subr.mxu0 0.0
        %743 = vmatpush1.msra.mxu0 0.0
        %744 = vmatprep.subr.mxu0 0.0
        %745 = vmatpush1.msra.mxu0 0.0
        %746 = vmatprep.mubr.f32.mxu0 0.0
        %747 = vmatmul.mubr.f32.gmra.mrb[0].mxu0 %v664
        %v748 = vpop.f32.mrb[0].mxu0
        %v749 = vadd.f32 0.0, %v748
        %v750 = vpop.f32.mrb[0].mxu0
        %751 = vdwg.mxu0
        %v752 = vadd.f32 %v663, %v749
        %v753 = vmax.f32 %v752, 0.0
        %754 = vst [vmem:[%s199 - $0x7] sm:$0x80] %v753
        %s755 = sand.u32 %s97, 1
        %s756 = scalar_lea.sflag [#allocation5], %s755
        %s757 = sand.u32 %s97, 1
        %s758 = scalar_lea.vmem [#allocation8], %s757
        // Predicated region
        $region41: #{tpu_custom_call.1} parent=31 // pred_check
          %p759 = pneg %p107
        $region42: #{tpu_custom_call.1} parent=31 // pred_check_branch
          %761 = sbr.rel (%p759) target = $region44
        $region43: #{tpu_custom_call.1} parent=31 // pred_region
          %s763 = ssub.s32 16, 16
          %764 = vsyncadd %s756, %s763
          %s765 = smul.addr %s21, 16
          %s766 = scalar_lea.hbm %s3, %s765
          %s768 = sshll.u32 %s758, 4
          %s769 = int_to_ptr.vmem [resolvable:$true] %s768
          %771 = dma.vmem_to_hbm [thread:$0]  %s769, 16, %s766, %s756
        $region44: #{tpu_custom_call.1} parent=31 // pred_fallthru
          _
      $region32: #{tpu_custom_call.1} parent=5 // pred_fallthru
        _
      %p772 = scmp.le.s32.totalorder 2, %s16
      // Predicated region
      $region45: #{tpu_custom_call.1} parent=5 // pred_check
        %p773 = pneg %p772
      $region46: #{tpu_custom_call.1} parent=5 // pred_check_branch
        %775 = sbr.rel (%p773) target = $region48
      $region47: #{tpu_custom_call.1} parent=5 // pred_region
        %s776 = ssub.s32 %s16, 2
        // Predicated region
        $region49: #{tpu_custom_call.1} parent=47 // pred_check
          %p777 = pneg %p113
        $region50: #{tpu_custom_call.1} parent=47 // pred_check_branch
          %779 = sbr.rel (%p777) target = $region52
        $region51: #{tpu_custom_call.1} parent=47 // pred_region
          %s780 = sand.u32 %s98, 1
          %s781 = scalar_lea.sflag [#allocation5], %s780
          %s782 = sand.u32 %s98, 1
          %s783 = scalar_lea.vmem [#allocation8], %s782
          %784 = dma.done %s781, 16
        $region52: #{tpu_custom_call.1} parent=47 // pred_fallthru
          _
      $region48: #{tpu_custom_call.1} parent=5 // pred_fallthru
        _
    $region6: #{tpu_custom_call.1} parent=1 // loop_footer
      %s20 = sadd.s32 1, %s16
    $region7: #{tpu_custom_call.1} parent=1 // loop_footer_branch
      %15 = sbr.rel target = $region3
    $region8: #{tpu_custom_call.1} parent=1 // loop_exit
      _
    %785 = vsyncpa [#allocation4], 1
    %s786 = scalar_lea.sflag [#allocation4], 1
    %787 = vsyncpa %s786, 1
    %788 = vsyncpa [#allocation7], 1
    %789 = vsyncpa [#allocation5], 1
    %s790 = scalar_lea.sflag [#allocation5], 1
    %791 = vsyncpa %s790, 1

</llo_original>
